<compile_context>
chip_gen: v5e
topology: v5e:2x2
jax: 0.10.0
libtpu: 0.0.40
codegen_flags: <defaults>
</compile_context>

<pallas_src>
import jax
import jax.numpy as jnp
from jax.experimental import pallas as pl
from jax.experimental.pallas import tpu as pltpu


def _round_up(x, m):
    return (x + m - 1) // m * m


def rnn_kernel(emb_ref, w_ih_ref, w_hh_ref, b_rnn_ref, w_fc_ref, b_fc_ref,
               out_ref, xproj_ref):
    # emb_ref:   (S, TB, Ep)  bf16  padded embedded tokens for this batch tile
    # w_ih_ref:  (Ep, Hp)     bf16
    # w_hh_ref:  (Hp, Hp)     bf16
    # b_rnn_ref: (1, Hp)      f32   b_ih + b_hh (zero-padded)
    # w_fc_ref:  (Hp, Cp)     bf16
    # b_fc_ref:  (1, Cp)      f32
    # out_ref:   (TB, Cp)     f32   lane-dense padded output
    # xproj_ref: (S, TB, Hp)  f32   scratch: precomputed input projections
    S, TB, Ep = emb_ref.shape
    Hp = w_hh_ref.shape[0]

    # One big bf16 matmul for all timesteps (M = S*TB rows -> full MXU rows),
    # with the RNN bias folded in so it never appears on the serial chain.
    # Reshape is tile-exact: TB % 16 == 0 (bf16 sublane pack), Ep % 128 == 0.
    x_all = emb_ref[...].reshape(S * TB, Ep)
    xproj = jnp.dot(x_all, w_ih_ref[...], preferred_element_type=jnp.float32)
    xproj_ref[...] = (xproj + b_rnn_ref[...]).reshape(S, TB, Hp)

    def step(t, h):
        # Serial chain is only: h @ W_hh (bf16 MXU, K=Hp) + xproj[t] -> tanh.
        hh = jnp.dot(h.astype(jnp.bfloat16), w_hh_ref[...],
                     preferred_element_type=jnp.float32)
        return jnp.tanh(hh + xproj_ref[t])

    h0 = jnp.zeros((TB, Hp), jnp.float32)
    # Unroll capped at 8: enough for LLO to overlap matmul/tanh across steps
    # without blowing instruction memory / vreg live ranges for long S.
    h_last = jax.lax.fori_loop(0, S, step, h0, unroll=min(S, 8))

    # fc(hidden.squeeze(0)) on the padded tile (unmasked lane-dense store).
    out_ref[...] = (
        jnp.dot(h_last.astype(jnp.bfloat16), w_fc_ref[...],
                preferred_element_type=jnp.float32)
        + b_fc_ref[...])


def prepare_params(params):
    """One-time padding / bf16 cast of the model weights (do NOT call per forward)."""
    E, H = params["w_ih"].shape
    C = params["w_fc"].shape[1]
    V = params["embedding"].shape[0]
    Ep, Hp, Cp = _round_up(E, 128), _round_up(H, 128), _round_up(C, 128)

    emb_table = jnp.zeros((V, Ep), jnp.bfloat16).at[:, :E].set(
        params["embedding"].astype(jnp.bfloat16))
    w_ih = jnp.zeros((Ep, Hp), jnp.bfloat16).at[:E, :H].set(
        params["w_ih"].astype(jnp.bfloat16))
    w_hh = jnp.zeros((Hp, Hp), jnp.bfloat16).at[:H, :H].set(
        params["w_hh"].astype(jnp.bfloat16))
    b_rnn = jnp.zeros((1, Hp), jnp.float32).at[0, :H].set(
        params["b_ih"] + params["b_hh"])
    w_fc = jnp.zeros((Hp, Cp), jnp.bfloat16).at[:H, :C].set(
        params["w_fc"].astype(jnp.bfloat16))
    b_fc = jnp.zeros((1, Cp), jnp.float32).at[0, :C].set(params["b_fc"])

    return {"emb_table": emb_table, "w_ih": w_ih, "w_hh": w_hh,
            "b_rnn": b_rnn, "w_fc": w_fc, "b_fc": b_fc, "num_classes": C}


def _vmem_budget_bytes(S, TB, Ep, Hp, Cp):
    bf16, f32 = 2, 4
    emb_blk = S * TB * Ep * bf16 * 2                      # double-buffered input block
    xproj = S * TB * Hp * f32                             # scratch
    weights = (Ep * Hp + Hp * Hp + Hp * Cp) * bf16 * 2    # resident weight blocks
    biases = (Hp + Cp) * f32 * 2
    out_blk = TB * Cp * f32 * 2
    return emb_blk + xproj + weights + biases + out_blk


def simple_rnn_forward(text, text_lengths, prep):
    # text_lengths is unused in the PyTorch forward as well.
    del text_lengths
    # Embedding lookup is glue (plain-JAX gather from the pre-padded bf16 table).
    # TODO(synk): for large tables / long S, gather in-kernel from an HBM-resident
    # table (PrefetchScalarGridSpec token ids + make_async_copy) and stream the time
    # axis instead of materializing (S, Bp, Ep) and keeping it VMEM-resident.
    emb = prep["emb_table"][text]                         # (S, B, Ep) bf16
    S, B, Ep = emb.shape
    Hp = prep["w_hh"].shape[0]
    Cp = prep["w_fc"].shape[1]
    C = prep["num_classes"]

    # Batch padded to a multiple of 16 so bf16 reshapes inside the kernel are
    # tile-exact (bf16 packs 2 rows per sublane).
    Bp = _round_up(B, 16)
    if Bp <= 64:
        TB = Bp
    else:
        TB = 64
        Bp = _round_up(Bp, TB)

    emb_p = jnp.zeros((S, Bp, Ep), jnp.bfloat16).at[:, :B, :].set(emb)

    budget = _vmem_budget_bytes(S, TB, Ep, Hp, Cp)
    vmem_limit = min(max(2 * budget + (1 << 20), 16 << 20), 48 << 20)

    grid_spec = pltpu.PrefetchScalarGridSpec(
        num_scalar_prefetch=0,
        grid=(Bp // TB,),
        in_specs=[
            pl.BlockSpec((S, TB, Ep), lambda b: (0, b, 0)),   # batch-tiled activations
            pl.BlockSpec((Ep, Hp), lambda b: (0, 0)),         # weights: constant block
            pl.BlockSpec((Hp, Hp), lambda b: (0, 0)),
            pl.BlockSpec((1, Hp), lambda b: (0, 0)),
            pl.BlockSpec((Hp, Cp), lambda b: (0, 0)),
            pl.BlockSpec((1, Cp), lambda b: (0, 0)),
        ],
        out_specs=pl.BlockSpec((TB, Cp), lambda b: (b, 0)),
        scratch_shapes=[pltpu.VMEM((S, TB, Hp), jnp.float32)],
    )

    out_p = pl.pallas_call(
        rnn_kernel,
        out_shape=jax.ShapeDtypeStruct((Bp, Cp), jnp.float32),
        grid_spec=grid_spec,
        compiler_params=pltpu.CompilerParams(
            dimension_semantics=("parallel",),   # batch tiles shard across TCs (v7x)
            vmem_limit_bytes=vmem_limit),
    )(emb_p, prep["w_ih"], prep["w_hh"], prep["b_rnn"], prep["w_fc"],
      prep["b_fc"])

    return out_p[:B, :C]


def simple_rnn_reference(text, params):
    """Pure-JAX f32 reference for correctness checking."""
    emb = params["embedding"][text].astype(jnp.float32)      # (S, B, E)
    B = emb.shape[1]
    H = params["w_hh"].shape[0]
    b_rnn = params["b_ih"] + params["b_hh"]

    def step(h, x_t):
        h_new = jnp.tanh(x_t @ params["w_ih"] + h @ params["w_hh"] + b_rnn)
        return h_new, h_new

    h0 = jnp.zeros((B, H), jnp.float32)
    h_last, _ = jax.lax.scan(step, h0, emb)
    return h_last @ params["w_fc"] + params["b_fc"]


def init_params(key, num_embeddings, num_classes, embedding_dim, hidden_dim):
    ks = jax.random.split(key, 7)
    scale = 0.1
    return {
        "embedding": jax.random.normal(ks[0], (num_embeddings, embedding_dim), jnp.float32),
        # stored pre-transposed relative to PyTorch (weight_ih_l0 is (H, E)):
        "w_ih": scale * jax.random.normal(ks[1], (embedding_dim, hidden_dim), jnp.float32),
        "w_hh": scale * jax.random.normal(ks[2], (hidden_dim, hidden_dim), jnp.float32),
        "b_ih": scale * jax.random.normal(ks[3], (hidden_dim,), jnp.float32),
        "b_hh": scale * jax.random.normal(ks[4], (hidden_dim,), jnp.float32),
        "w_fc": scale * jax.random.normal(ks[5], (hidden_dim, num_classes), jnp.float32),
        "b_fc": scale * jax.random.normal(ks[6], (num_classes,), jnp.float32),
    }


if __name__ == "__main__":
    # Small shapes consistent with the module's forward.
    num_embeddings, num_classes = 50, 8
    embedding_dim, hidden_dim = 32, 32
    seq_len, batch = 8, 2

    key = jax.random.PRNGKey(0)
    k_params, k_text = jax.random.split(key)
    params = init_params(k_params, num_embeddings, num_classes,
                         embedding_dim, hidden_dim)
    prep = prepare_params(params)   # one-time padding / bf16 cast

    text = jax.random.randint(k_text, (seq_len, batch), 0, num_embeddings,
                              dtype=jnp.int32)
    text_lengths = jnp.full((batch,), seq_len, dtype=jnp.int32)  # unused, as in PyTorch

    out = simple_rnn_forward(text, text_lengths, prep)
    out = jax.block_until_ready(out)

    ref = simple_rnn_reference(text, params)
    assert out.shape == (batch, num_classes)
    # bf16 matmuls with f32 accumulation -> loosened tolerance vs the f32 reference.
    assert jnp.allclose(out, ref, atol=2e-2, rtol=2e-2), (out, ref)

    print("KERNEL_OK")
</pallas_src>

<mosaic_0001>
module attributes {stable_mosaic.version = 11 : i64} {
  func.func @rnn_kernel(%arg0: i32, %arg1: memref<8x16x128xbf16, #tpu.memory_space<vmem>>, %arg2: memref<128x128xbf16, #tpu.memory_space<vmem>>, %arg3: memref<128x128xbf16, #tpu.memory_space<vmem>>, %arg4: memref<1x128xf32, #tpu.memory_space<vmem>>, %arg5: memref<128x128xbf16, #tpu.memory_space<vmem>>, %arg6: memref<1x128xf32, #tpu.memory_space<vmem>>, %arg7: memref<16x128xf32, #tpu.memory_space<vmem>>, %arg8: memref<8x16x128xf32, #tpu.memory_space<vmem>>) attributes {dimension_semantics = [#tpu.dimension_semantics<parallel>], iteration_bounds = array<i64: 1>, scalar_prefetch = 0 : i64, scratch_operands = 1 : i64, tpu.core_type = #tpu.core_type<tc>, window_params = [{transform_indices = @transform_0, window_bounds = array<i64: 8, 16, 128>}, {pipeline_mode = #tpu.pipeline_mode<synchronous>, transform_indices = @transform_1, window_bounds = array<i64: 128, 128>}, {pipeline_mode = #tpu.pipeline_mode<synchronous>, transform_indices = @transform_2, window_bounds = array<i64: 128, 128>}, {pipeline_mode = #tpu.pipeline_mode<synchronous>, transform_indices = @transform_3, window_bounds = array<i64: 1, 128>}, {pipeline_mode = #tpu.pipeline_mode<synchronous>, transform_indices = @transform_4, window_bounds = array<i64: 128, 128>}, {pipeline_mode = #tpu.pipeline_mode<synchronous>, transform_indices = @transform_5, window_bounds = array<i64: 1, 128>}, {transform_indices = @transform_6, window_bounds = array<i64: 16, 128>}]} {
    %c0 = arith.constant 0 : index
    %c0_0 = arith.constant 0 : index
    %c0_1 = arith.constant 0 : index
    %0 = vector.load %arg1[%c0, %c0_0, %c0_1] : memref<8x16x128xbf16, #tpu.memory_space<vmem>>, vector<8x16x128xbf16>
    %1 = vector.shape_cast %0 : vector<8x16x128xbf16> to vector<128x128xbf16>
    %c0_2 = arith.constant 0 : index
    %c0_3 = arith.constant 0 : index
    %2 = vector.load %arg2[%c0_2, %c0_3] : memref<128x128xbf16, #tpu.memory_space<vmem>>, vector<128x128xbf16>
    %cst = arith.constant dense<0.000000e+00> : vector<128x128xf32>
    %3 = tpu.matmul %1, %2, %cst {dimension_numbers = #tpu.dot_dimension_numbers<[1], [0], [0], [1], [0, 0, 1, 1], [], []>} : vector<128x128xbf16>, vector<128x128xbf16>, vector<128x128xf32> -> vector<128x128xf32>
    %c0_4 = arith.constant 0 : index
    %c0_5 = arith.constant 0 : index
    %4 = vector.load %arg4[%c0_4, %c0_5] : memref<1x128xf32, #tpu.memory_space<vmem>>, vector<1x128xf32>
    %5 = vector.broadcast %4 : vector<1x128xf32> to vector<128x128xf32>
    %6 = arith.addf %3, %5 : vector<128x128xf32>
    %7 = vector.shape_cast %6 : vector<128x128xf32> to vector<8x16x128xf32>
    %c0_6 = arith.constant 0 : index
    %c0_7 = arith.constant 0 : index
    %c0_8 = arith.constant 0 : index
    %8 = vector.load %arg8[%c0_6, %c0_7, %c0_8] : memref<8x16x128xf32, #tpu.memory_space<vmem>>, vector<8x16x128xf32>
    tpu.vector_store %arg8[%c0_6, %c0_7, %c0_8], %7 {strides = array<i32>} : memref<8x16x128xf32, #tpu.memory_space<vmem>>, vector<8x16x128xf32>,
    %cst_9 = arith.constant 0.000000e+00 : f32
    %9 = vector.broadcast %cst_9 : f32 to vector<16x128xf32>
    %c0_i32 = arith.constant 0 : i32
    %10 = arith.truncf %9 : vector<16x128xf32> to vector<16x128xbf16>
    %c0_10 = arith.constant 0 : index
    %c0_11 = arith.constant 0 : index
    %11 = vector.load %arg3[%c0_10, %c0_11] : memref<128x128xbf16, #tpu.memory_space<vmem>>, vector<128x128xbf16>
    %cst_12 = arith.constant dense<0.000000e+00> : vector<16x128xf32>
    %12 = tpu.matmul %10, %11, %cst_12 {dimension_numbers = #tpu.dot_dimension_numbers<[1], [0], [0], [1], [0, 0, 1, 1], [], []>} : vector<16x128xbf16>, vector<128x128xbf16>, vector<16x128xf32> -> vector<16x128xf32>
    %13 = arith.index_cast %c0_i32 : i32 to index
    %c0_13 = arith.constant 0 : index
    %c0_14 = arith.constant 0 : index
    %14 = vector.load %arg8[%13, %c0_13, %c0_14] : memref<8x16x128xf32, #tpu.memory_space<vmem>>, vector<1x16x128xf32>
    %15 = vector.shape_cast %14 : vector<1x16x128xf32> to vector<16x128xf32>
    %16 = arith.addf %12, %15 : vector<16x128xf32>
    %17 = math.tanh %16 : vector<16x128xf32>
    %c1_i32 = arith.constant 1 : i32
    %18 = arith.truncf %17 : vector<16x128xf32> to vector<16x128xbf16>
    %c0_15 = arith.constant 0 : index
    %c0_16 = arith.constant 0 : index
    %19 = vector.load %arg3[%c0_15, %c0_16] : memref<128x128xbf16, #tpu.memory_space<vmem>>, vector<128x128xbf16>
    %cst_17 = arith.constant dense<0.000000e+00> : vector<16x128xf32>
    %20 = tpu.matmul %18, %19, %cst_17 {dimension_numbers = #tpu.dot_dimension_numbers<[1], [0], [0], [1], [0, 0, 1, 1], [], []>} : vector<16x128xbf16>, vector<128x128xbf16>, vector<16x128xf32> -> vector<16x128xf32>
    %21 = arith.index_cast %c1_i32 : i32 to index
    %c0_18 = arith.constant 0 : index
    %c0_19 = arith.constant 0 : index
    %22 = vector.load %arg8[%21, %c0_18, %c0_19] : memref<8x16x128xf32, #tpu.memory_space<vmem>>, vector<1x16x128xf32>
    %23 = vector.shape_cast %22 : vector<1x16x128xf32> to vector<16x128xf32>
    %24 = arith.addf %20, %23 : vector<16x128xf32>
    %25 = math.tanh %24 : vector<16x128xf32>
    %c2_i32 = arith.constant 2 : i32
    %26 = arith.truncf %25 : vector<16x128xf32> to vector<16x128xbf16>
    %c0_20 = arith.constant 0 : index
    %c0_21 = arith.constant 0 : index
    %27 = vector.load %arg3[%c0_20, %c0_21] : memref<128x128xbf16, #tpu.memory_space<vmem>>, vector<128x128xbf16>
    %cst_22 = arith.constant dense<0.000000e+00> : vector<16x128xf32>
    %28 = tpu.matmul %26, %27, %cst_22 {dimension_numbers = #tpu.dot_dimension_numbers<[1], [0], [0], [1], [0, 0, 1, 1], [], []>} : vector<16x128xbf16>, vector<128x128xbf16>, vector<16x128xf32> -> vector<16x128xf32>
    %29 = arith.index_cast %c2_i32 : i32 to index
    %c0_23 = arith.constant 0 : index
    %c0_24 = arith.constant 0 : index
    %30 = vector.load %arg8[%29, %c0_23, %c0_24] : memref<8x16x128xf32, #tpu.memory_space<vmem>>, vector<1x16x128xf32>
    %31 = vector.shape_cast %30 : vector<1x16x128xf32> to vector<16x128xf32>
    %32 = arith.addf %28, %31 : vector<16x128xf32>
    %33 = math.tanh %32 : vector<16x128xf32>
    %c3_i32 = arith.constant 3 : i32
    %34 = arith.truncf %33 : vector<16x128xf32> to vector<16x128xbf16>
    %c0_25 = arith.constant 0 : index
    %c0_26 = arith.constant 0 : index
    %35 = vector.load %arg3[%c0_25, %c0_26] : memref<128x128xbf16, #tpu.memory_space<vmem>>, vector<128x128xbf16>
    %cst_27 = arith.constant dense<0.000000e+00> : vector<16x128xf32>
    %36 = tpu.matmul %34, %35, %cst_27 {dimension_numbers = #tpu.dot_dimension_numbers<[1], [0], [0], [1], [0, 0, 1, 1], [], []>} : vector<16x128xbf16>, vector<128x128xbf16>, vector<16x128xf32> -> vector<16x128xf32>
    %37 = arith.index_cast %c3_i32 : i32 to index
    %c0_28 = arith.constant 0 : index
    %c0_29 = arith.constant 0 : index
    %38 = vector.load %arg8[%37, %c0_28, %c0_29] : memref<8x16x128xf32, #tpu.memory_space<vmem>>, vector<1x16x128xf32>
    %39 = vector.shape_cast %38 : vector<1x16x128xf32> to vector<16x128xf32>
    %40 = arith.addf %36, %39 : vector<16x128xf32>
    %41 = math.tanh %40 : vector<16x128xf32>
    %c4_i32 = arith.constant 4 : i32
    %42 = arith.truncf %41 : vector<16x128xf32> to vector<16x128xbf16>
    %c0_30 = arith.constant 0 : index
    %c0_31 = arith.constant 0 : index
    %43 = vector.load %arg3[%c0_30, %c0_31] : memref<128x128xbf16, #tpu.memory_space<vmem>>, vector<128x128xbf16>
    %cst_32 = arith.constant dense<0.000000e+00> : vector<16x128xf32>
    %44 = tpu.matmul %42, %43, %cst_32 {dimension_numbers = #tpu.dot_dimension_numbers<[1], [0], [0], [1], [0, 0, 1, 1], [], []>} : vector<16x128xbf16>, vector<128x128xbf16>, vector<16x128xf32> -> vector<16x128xf32>
    %45 = arith.index_cast %c4_i32 : i32 to index
    %c0_33 = arith.constant 0 : index
    %c0_34 = arith.constant 0 : index
    %46 = vector.load %arg8[%45, %c0_33, %c0_34] : memref<8x16x128xf32, #tpu.memory_space<vmem>>, vector<1x16x128xf32>
    %47 = vector.shape_cast %46 : vector<1x16x128xf32> to vector<16x128xf32>
    %48 = arith.addf %44, %47 : vector<16x128xf32>
    %49 = math.tanh %48 : vector<16x128xf32>
    %c5_i32 = arith.constant 5 : i32
    %50 = arith.truncf %49 : vector<16x128xf32> to vector<16x128xbf16>
    %c0_35 = arith.constant 0 : index
    %c0_36 = arith.constant 0 : index
    %51 = vector.load %arg3[%c0_35, %c0_36] : memref<128x128xbf16, #tpu.memory_space<vmem>>, vector<128x128xbf16>
    %cst_37 = arith.constant dense<0.000000e+00> : vector<16x128xf32>
    %52 = tpu.matmul %50, %51, %cst_37 {dimension_numbers = #tpu.dot_dimension_numbers<[1], [0], [0], [1], [0, 0, 1, 1], [], []>} : vector<16x128xbf16>, vector<128x128xbf16>, vector<16x128xf32> -> vector<16x128xf32>
    %53 = arith.index_cast %c5_i32 : i32 to index
    %c0_38 = arith.constant 0 : index
    %c0_39 = arith.constant 0 : index
    %54 = vector.load %arg8[%53, %c0_38, %c0_39] : memref<8x16x128xf32, #tpu.memory_space<vmem>>, vector<1x16x128xf32>
    %55 = vector.shape_cast %54 : vector<1x16x128xf32> to vector<16x128xf32>
    %56 = arith.addf %52, %55 : vector<16x128xf32>
    %57 = math.tanh %56 : vector<16x128xf32>
    %c6_i32 = arith.constant 6 : i32
    %58 = arith.truncf %57 : vector<16x128xf32> to vector<16x128xbf16>
    %c0_40 = arith.constant 0 : index
    %c0_41 = arith.constant 0 : index
    %59 = vector.load %arg3[%c0_40, %c0_41] : memref<128x128xbf16, #tpu.memory_space<vmem>>, vector<128x128xbf16>
    %cst_42 = arith.constant dense<0.000000e+00> : vector<16x128xf32>
    %60 = tpu.matmul %58, %59, %cst_42 {dimension_numbers = #tpu.dot_dimension_numbers<[1], [0], [0], [1], [0, 0, 1, 1], [], []>} : vector<16x128xbf16>, vector<128x128xbf16>, vector<16x128xf32> -> vector<16x128xf32>
    %61 = arith.index_cast %c6_i32 : i32 to index
    %c0_43 = arith.constant 0 : index
    %c0_44 = arith.constant 0 : index
    %62 = vector.load %arg8[%61, %c0_43, %c0_44] : memref<8x16x128xf32, #tpu.memory_space<vmem>>, vector<1x16x128xf32>
    %63 = vector.shape_cast %62 : vector<1x16x128xf32> to vector<16x128xf32>
    %64 = arith.addf %60, %63 : vector<16x128xf32>
    %65 = math.tanh %64 : vector<16x128xf32>
    %c7_i32 = arith.constant 7 : i32
    %66 = arith.truncf %65 : vector<16x128xf32> to vector<16x128xbf16>
    %c0_45 = arith.constant 0 : index
    %c0_46 = arith.constant 0 : index
    %67 = vector.load %arg3[%c0_45, %c0_46] : memref<128x128xbf16, #tpu.memory_space<vmem>>, vector<128x128xbf16>
    %cst_47 = arith.constant dense<0.000000e+00> : vector<16x128xf32>
    %68 = tpu.matmul %66, %67, %cst_47 {dimension_numbers = #tpu.dot_dimension_numbers<[1], [0], [0], [1], [0, 0, 1, 1], [], []>} : vector<16x128xbf16>, vector<128x128xbf16>, vector<16x128xf32> -> vector<16x128xf32>
    %69 = arith.index_cast %c7_i32 : i32 to index
    %c0_48 = arith.constant 0 : index
    %c0_49 = arith.constant 0 : index
    %70 = vector.load %arg8[%69, %c0_48, %c0_49] : memref<8x16x128xf32, #tpu.memory_space<vmem>>, vector<1x16x128xf32>
    %71 = vector.shape_cast %70 : vector<1x16x128xf32> to vector<16x128xf32>
    %72 = arith.addf %68, %71 : vector<16x128xf32>
    %73 = math.tanh %72 : vector<16x128xf32>
    %c8_i32 = arith.constant 8 : i32
    %74 = arith.truncf %73 : vector<16x128xf32> to vector<16x128xbf16>
    %c0_50 = arith.constant 0 : index
    %c0_51 = arith.constant 0 : index
    %75 = vector.load %arg5[%c0_50, %c0_51] : memref<128x128xbf16, #tpu.memory_space<vmem>>, vector<128x128xbf16>
    %cst_52 = arith.constant dense<0.000000e+00> : vector<16x128xf32>
    %76 = tpu.matmul %74, %75, %cst_52 {dimension_numbers = #tpu.dot_dimension_numbers<[1], [0], [0], [1], [0, 0, 1, 1], [], []>} : vector<16x128xbf16>, vector<128x128xbf16>, vector<16x128xf32> -> vector<16x128xf32>
    %c0_53 = arith.constant 0 : index
    %c0_54 = arith.constant 0 : index
    %77 = vector.load %arg6[%c0_53, %c0_54] : memref<1x128xf32, #tpu.memory_space<vmem>>, vector<1x128xf32>
    %78 = vector.broadcast %77 : vector<1x128xf32> to vector<16x128xf32>
    %79 = arith.addf %76, %78 : vector<16x128xf32>
    %c0_55 = arith.constant 0 : index
    %c0_56 = arith.constant 0 : index
    %80 = vector.load %arg7[%c0_55, %c0_56] : memref<16x128xf32, #tpu.memory_space<vmem>>, vector<16x128xf32>
    tpu.vector_store %arg7[%c0_55, %c0_56], %79 {strides = array<i32>} : memref<16x128xf32, #tpu.memory_space<vmem>>, vector<16x128xf32>,
    return
  }
  func.func @transform_0(%arg0: i32) -> (i32, i32, i32) {
    %c0_i32 = arith.constant 0 : i32
    %c0_i32_0 = arith.constant 0 : i32
    %c0_i32_1 = arith.constant 0 : i32
    return %c0_i32, %arg0, %c0_i32_0 : i32, i32, i32
  }
  func.func @transform_1(%arg0: i32) -> (i32, i32) {
    %c0_i32 = arith.constant 0 : i32
    %c0_i32_0 = arith.constant 0 : i32
    %c0_i32_1 = arith.constant 0 : i32
    return %c0_i32, %c0_i32_0 : i32, i32
  }
  func.func @transform_2(%arg0: i32) -> (i32, i32) {
    %c0_i32 = arith.constant 0 : i32
    %c0_i32_0 = arith.constant 0 : i32
    %c0_i32_1 = arith.constant 0 : i32
    return %c0_i32, %c0_i32_0 : i32, i32
  }
  func.func @transform_3(%arg0: i32) -> (i32, i32) {
    %c0_i32 = arith.constant 0 : i32
    %c0_i32_0 = arith.constant 0 : i32
    %c0_i32_1 = arith.constant 0 : i32
    return %c0_i32, %c0_i32_0 : i32, i32
  }
  func.func @transform_4(%arg0: i32) -> (i32, i32) {
    %c0_i32 = arith.constant 0 : i32
    %c0_i32_0 = arith.constant 0 : i32
    %c0_i32_1 = arith.constant 0 : i32
    return %c0_i32, %c0_i32_0 : i32, i32
  }
  func.func @transform_5(%arg0: i32) -> (i32, i32) {
    %c0_i32 = arith.constant 0 : i32
    %c0_i32_0 = arith.constant 0 : i32
    %c0_i32_1 = arith.constant 0 : i32
    return %c0_i32, %c0_i32_0 : i32, i32
  }
  func.func @transform_6(%arg0: i32) -> (i32, i32) {
    %c0_i32 = arith.constant 0 : i32
    %c0_i32_0 = arith.constant 0 : i32
    return %arg0, %c0_i32 : i32, i32
  }
}

</mosaic_0001>

<llo_original>
// kernel: tpu_custom_call.1
$region0: #{tpu_custom_call.1}
  #allocation0 [shape = 'u32[]', space=smem, size = 0x4, offset = 0x4, fixed_abs, tag = 'smem constant byte address 0x4 - core index']
  #allocation1 [shape = 'u32[72,128]{1,0:T(1,128)}', space=vmem, size = 0x9000, scoped, tag = 'internal scratch']
  #allocation2 [shape = 'f32[8,16,128]{2,1,0:T(8,128)}', space=vmem, size = 0x10000, scoped, tag = 'scratch operand']
  %s0 = inlined_call_operand.hbm [shape: bf16[8,16,128], index: 0, kind: input, shape index: {}]
  %s1 = inlined_call_operand.hbm [shape: bf16[128,128], index: 1, kind: input, shape index: {}]
  %s2 = inlined_call_operand.hbm [shape: bf16[128,128], index: 2, kind: input, shape index: {}]
  %s3 = inlined_call_operand.vmem [shape: f32[1,128], index: 3, kind: input, shape index: {}]
  %s4 = inlined_call_operand.hbm [shape: bf16[128,128], index: 4, kind: input, shape index: {}]
  %s5 = inlined_call_operand.vmem [shape: f32[1,128], index: 5, kind: input, shape index: {}]
  %s6 = inlined_call_operand.hbm [shape: f32[16,128], index: 6, kind: output, shape index: {}]
  %s7 = sld [smem:[#allocation0]]
  $region50: #{tpu_custom_call.1} parent=0
    _
  %s9 = ssub.s32 1, %s7
  %s10 = scalar_select 0, %s9, %s7
  $region1: #{tpu_custom_call.1} parent=0
    #allocation3 [shape = 'u8[32768]{0}', space=vmem, size = 0x8000, scoped, tag = 'input window, operand 0, single buffered']
    #allocation4 [shape = 's32[1]{0}', space=sflag, size = 0x4, scoped, tag = 'scoped memory for tpu_custom_call.1']
    #allocation5 [shape = 's32[1]{0}', space=sflag, size = 0x4, scoped, tag = 'scoped memory for tpu_custom_call.1']
    #allocation6 [shape = 'u8[32768]{0}', space=vmem, size = 0x8000, scoped, tag = 'input window, operand 1, single buffered']
    #allocation7 [shape = 's32[1]{0}', space=sflag, size = 0x4, scoped, tag = 'scoped memory for tpu_custom_call.1']
    #allocation8 [shape = 'u8[32768]{0}', space=vmem, size = 0x8000, scoped, tag = 'input window, operand 2, single buffered']
    #allocation9 [shape = 'u8[32768]{0}', space=vmem, size = 0x8000, scoped, tag = 'input window, operand 4, single buffered']
    #allocation10 [shape = 's32[1]{0}', space=sflag, size = 0x4, scoped, tag = 'scoped memory for tpu_custom_call.1']
    #allocation11 [shape = 'u8[8192]{0}', space=vmem, size = 0x2000, scoped, tag = 'output window, operand 0, single buffered']
    %11 = vsyncpa [#allocation4], 0
    %12 = vsyncpa [#allocation7], 0
    %13 = vsyncpa [#allocation10], 0
    %14 = vsyncpa [#allocation5], 0
    // Predicated region
    $region2: #{tpu_custom_call.1} parent=1 // pred_check
      _
    $region3: #{tpu_custom_call.1} parent=1 // pred_check_branch
      %16 = sbr.rel (0) target = $region5
    $region4: #{tpu_custom_call.1} parent=1 // pred_region
      %18 = vsyncadd [#allocation4], 0
      %s19 = sshll.u32 %s0, 4
      %s20 = int_to_ptr.hbm [resolvable:$true] %s19
      %s21 = sshll.u32 [#allocation3], 4
      %s22 = int_to_ptr.vmem [resolvable:$true] %s21
      %27 = dma.hbm_to_vmem [thread:$0]  %s20, 1024, %s22, [#allocation4], 64, 64, 4
    $region5: #{tpu_custom_call.1} parent=1 // pred_fallthru
      _
    // Predicated region
    $region6: #{tpu_custom_call.1} parent=1 // pred_check
      _
    $region7: #{tpu_custom_call.1} parent=1 // pred_check_branch
      %29 = sbr.rel (0) target = $region9
    $region8: #{tpu_custom_call.1} parent=1 // pred_region
      %31 = vsyncadd [#allocation7], 0
      %s32 = sshll.u32 %s1, 4
      %s33 = int_to_ptr.hbm [resolvable:$true] %s32
      %s34 = sshll.u32 [#allocation6], 4
      %s35 = int_to_ptr.vmem [resolvable:$true] %s34
      %40 = dma.hbm_to_vmem [thread:$0]  %s33, 1024, %s35, [#allocation7], 64, 64, 4
    $region9: #{tpu_custom_call.1} parent=1 // pred_fallthru
      _
    // Predicated region
    $region10: #{tpu_custom_call.1} parent=1 // pred_check
      _
    $region11: #{tpu_custom_call.1} parent=1 // pred_check_branch
      %42 = sbr.rel (0) target = $region13
    $region12: #{tpu_custom_call.1} parent=1 // pred_region
      %44 = vsyncadd [#allocation7], 0
      %s45 = sshll.u32 %s2, 4
      %s46 = int_to_ptr.hbm [resolvable:$true] %s45
      %s47 = sshll.u32 [#allocation8], 4
      %s48 = int_to_ptr.vmem [resolvable:$true] %s47
      %53 = dma.hbm_to_vmem [thread:$0]  %s46, 1024, %s48, [#allocation7], 64, 64, 4
    $region13: #{tpu_custom_call.1} parent=1 // pred_fallthru
      _
    // Predicated region
    $region14: #{tpu_custom_call.1} parent=1 // pred_check
      _
    $region15: #{tpu_custom_call.1} parent=1 // pred_check_branch
      %55 = sbr.rel (0) target = $region17
    $region16: #{tpu_custom_call.1} parent=1 // pred_region
      _
    $region17: #{tpu_custom_call.1} parent=1 // pred_fallthru
      _
    // Predicated region
    $region18: #{tpu_custom_call.1} parent=1 // pred_check
      _
    $region19: #{tpu_custom_call.1} parent=1 // pred_check_branch
      %57 = sbr.rel (0) target = $region21
    $region20: #{tpu_custom_call.1} parent=1 // pred_region
      %59 = vsyncadd [#allocation10], 0
      %s60 = sshll.u32 %s4, 4
      %s61 = int_to_ptr.hbm [resolvable:$true] %s60
      %s62 = sshll.u32 [#allocation9], 4
      %s63 = int_to_ptr.vmem [resolvable:$true] %s62
      %68 = dma.hbm_to_vmem [thread:$0]  %s61, 1024, %s63, [#allocation10], 64, 64, 4
    $region21: #{tpu_custom_call.1} parent=1 // pred_fallthru
      _
    // Predicated region
    $region22: #{tpu_custom_call.1} parent=1 // pred_check
      _
    $region23: #{tpu_custom_call.1} parent=1 // pred_check_branch
      %70 = sbr.rel (0) target = $region25
    $region24: #{tpu_custom_call.1} parent=1 // pred_region
      _
    $region25: #{tpu_custom_call.1} parent=1 // pred_fallthru
      _
    // Predicated region
    $region26: #{tpu_custom_call.1} parent=1 // pred_check
      _
    $region27: #{tpu_custom_call.1} parent=1 // pred_check_branch
      %72 = sbr.rel (0) target = $region29
    $region28: #{tpu_custom_call.1} parent=1 // pred_region
      %74 = dma.done [#allocation4], 1024
    $region29: #{tpu_custom_call.1} parent=1 // pred_fallthru
      _
    // Predicated region
    $region30: #{tpu_custom_call.1} parent=1 // pred_check
      _
    $region31: #{tpu_custom_call.1} parent=1 // pred_check_branch
      %76 = sbr.rel (0) target = $region33
    $region32: #{tpu_custom_call.1} parent=1 // pred_region
      %78 = dma.done [#allocation7], 1024
    $region33: #{tpu_custom_call.1} parent=1 // pred_fallthru
      _
    // Predicated region
    $region34: #{tpu_custom_call.1} parent=1 // pred_check
      _
    $region35: #{tpu_custom_call.1} parent=1 // pred_check_branch
      %80 = sbr.rel (0) target = $region37
    $region36: #{tpu_custom_call.1} parent=1 // pred_region
      %82 = dma.done [#allocation7], 1024
    $region37: #{tpu_custom_call.1} parent=1 // pred_fallthru
      _
    // Predicated region
    $region38: #{tpu_custom_call.1} parent=1 // pred_check
      _
    $region39: #{tpu_custom_call.1} parent=1 // pred_check_branch
      %84 = sbr.rel (0) target = $region41
    $region40: #{tpu_custom_call.1} parent=1 // pred_region
      %86 = dma.done [#allocation10], 1024
    $region41: #{tpu_custom_call.1} parent=1 // pred_fallthru
      _
    %v88 = vld [vmem:[#allocation3] sm:$0xf]
    %v89 = vld [vmem:[#allocation3 + $0x4] sm:$0xf]
    %v90 = vld [vmem:[#allocation3 + $0x8] sm:$0xf]
    %v91 = vld [vmem:[#allocation3 + $0xc] sm:$0xf]
    %v92 = vld [vmem:[#allocation3 + $0x10] sm:$0xf]
    %v93 = vld [vmem:[#allocation3 + $0x14] sm:$0xf]
    %v94 = vld [vmem:[#allocation3 + $0x18] sm:$0xf]
    %v95 = vld [vmem:[#allocation3 + $0x1c] sm:$0xf]
    %v96 = vld [vmem:[#allocation3 + $0x20] sm:$0xf]
    %v97 = vld [vmem:[#allocation3 + $0x24] sm:$0xf]
    %v98 = vld [vmem:[#allocation3 + $0x28] sm:$0xf]
    %v99 = vld [vmem:[#allocation3 + $0x2c] sm:$0xf]
    %v100 = vld [vmem:[#allocation3 + $0x30] sm:$0xf]
    %v101 = vld [vmem:[#allocation3 + $0x34] sm:$0xf]
    %v102 = vld [vmem:[#allocation3 + $0x38] sm:$0xf]
    %v103 = vld [vmem:[#allocation3 + $0x3c] sm:$0xf]
    %v104 = vld [vmem:[#allocation6] sm:$0xf]
    %v105 = vld [vmem:[#allocation6 + $0x4] sm:$0xf]
    %v106 = vld [vmem:[#allocation6 + $0x8] sm:$0xf]
    %v107 = vld [vmem:[#allocation6 + $0xc] sm:$0xf]
    %v108 = vld [vmem:[#allocation6 + $0x10] sm:$0xf]
    %v109 = vld [vmem:[#allocation6 + $0x14] sm:$0xf]
    %v110 = vld [vmem:[#allocation6 + $0x18] sm:$0xf]
    %v111 = vld [vmem:[#allocation6 + $0x1c] sm:$0xf]
    %v112 = vld [vmem:[#allocation6 + $0x20] sm:$0xf]
    %v113 = vld [vmem:[#allocation6 + $0x24] sm:$0xf]
    %v114 = vld [vmem:[#allocation6 + $0x28] sm:$0xf]
    %v115 = vld [vmem:[#allocation6 + $0x2c] sm:$0xf]
    %v116 = vld [vmem:[#allocation6 + $0x30] sm:$0xf]
    %v117 = vld [vmem:[#allocation6 + $0x34] sm:$0xf]
    %v118 = vld [vmem:[#allocation6 + $0x38] sm:$0xf]
    %v119 = vld [vmem:[#allocation6 + $0x3c] sm:$0xf]
    %v120 = vld [vmem:[%s3] sm:$0x1]
    %v122 = vperm.slane %v120, 0
    %v140 = vunpack.c.l.b16 %v88
    %v141 = vunpack.c.l.b16 %v89
    %v142 = vunpack.c.l.b16 %v90
    %v143 = vunpack.c.l.b16 %v91
    %v144 = vunpack.c.l.b16 %v92
    %v145 = vunpack.c.l.b16 %v93
    %v146 = vunpack.c.l.b16 %v94
    %v147 = vunpack.c.l.b16 %v95
    %v148 = vunpack.c.l.b16 %v96
    %v149 = vunpack.c.l.b16 %v97
    %v150 = vunpack.c.l.b16 %v98
    %v151 = vunpack.c.l.b16 %v99
    %v152 = vunpack.c.l.b16 %v100
    %v153 = vunpack.c.l.b16 %v101
    %v154 = vunpack.c.l.b16 %v102
    %v155 = vunpack.c.l.b16 %v103
    %v156 = vpack.c.b16 %v141, %v140
    %v157 = vpack.c.b16 %v143, %v142
    %v158 = vpack.c.b16 %v145, %v144
    %v159 = vpack.c.b16 %v147, %v146
    %v160 = vpack.c.b16 %v149, %v148
    %v161 = vpack.c.b16 %v151, %v150
    %v162 = vpack.c.b16 %v153, %v152
    %v163 = vpack.c.b16 %v155, %v154
    %v188 = vunpack.c.l.b16 %v104
    %v189 = vunpack.c.l.b16 %v105
    %v190 = vunpack.c.l.b16 %v106
    %v191 = vunpack.c.l.b16 %v107
    %v192 = vunpack.c.l.b16 %v108
    %v193 = vunpack.c.l.b16 %v109
    %v194 = vunpack.c.l.b16 %v110
    %v195 = vunpack.c.l.b16 %v111
    %v196 = vunpack.c.l.b16 %v112
    %v197 = vunpack.c.l.b16 %v113
    %v198 = vunpack.c.l.b16 %v114
    %v199 = vunpack.c.l.b16 %v115
    %v200 = vunpack.c.l.b16 %v116
    %v201 = vunpack.c.l.b16 %v117
    %v202 = vunpack.c.l.b16 %v118
    %v203 = vunpack.c.l.b16 %v119
    %v204 = vpack.c.b16 %v189, %v188
    %v205 = vpack.c.b16 %v191, %v190
    %v206 = vpack.c.b16 %v193, %v192
    %v207 = vpack.c.b16 %v195, %v194
    %v208 = vpack.c.b16 %v197, %v196
    %v209 = vpack.c.b16 %v199, %v198
    %v210 = vpack.c.b16 %v201, %v200
    %v211 = vpack.c.b16 %v203, %v202
    %220 = vmatpush.bf16.msra.mxu0 %v211
    %221 = vmatpush.bf16.msra.mxu0 %v210
    %222 = vmatpush.bf16.msra.mxu0 %v209
    %223 = vmatpush.bf16.msra.mxu0 %v208
    %224 = vmatpush.bf16.msra.mxu0 %v207
    %225 = vmatpush.bf16.msra.mxu0 %v206
    %226 = vmatpush.bf16.msra.mxu0 %v205
    %227 = vmatpush.bf16.msra.mxu0 %v204
    %228 = vmatmul.bf16.gmra.mxu0 %v156
    %v229 = vpop.f32.mrf.mxu0
    %v230 = vadd.f32 %v122, %v229
    %v231 = vpop.f32.mrf.mxu0
    %v232 = vadd.f32 %v122, %v231
    %233 = vmatmul.bf16.gmra.mxu0 %v157
    %v234 = vpop.f32.mrf.mxu0
    %v235 = vadd.f32 %v122, %v234
    %v236 = vpop.f32.mrf.mxu0
    %v237 = vadd.f32 %v122, %v236
    %238 = vmatmul.bf16.gmra.mxu0 %v158
    %v239 = vpop.f32.mrf.mxu0
    %v240 = vadd.f32 %v122, %v239
    %v241 = vpop.f32.mrf.mxu0
    %v242 = vadd.f32 %v122, %v241
    %243 = vmatmul.bf16.gmra.mxu0 %v159
    %v244 = vpop.f32.mrf.mxu0
    %v245 = vadd.f32 %v122, %v244
    %v246 = vpop.f32.mrf.mxu0
    %v247 = vadd.f32 %v122, %v246
    %248 = vmatmul.bf16.gmra.mxu0 %v160
    %v249 = vpop.f32.mrf.mxu0
    %v250 = vadd.f32 %v122, %v249
    %v251 = vpop.f32.mrf.mxu0
    %v252 = vadd.f32 %v122, %v251
    %253 = vmatmul.bf16.gmra.mxu0 %v161
    %v254 = vpop.f32.mrf.mxu0
    %v255 = vadd.f32 %v122, %v254
    %v256 = vpop.f32.mrf.mxu0
    %v257 = vadd.f32 %v122, %v256
    %258 = vmatmul.bf16.gmra.mxu0 %v162
    %v259 = vpop.f32.mrf.mxu0
    %v260 = vadd.f32 %v122, %v259
    %v261 = vpop.f32.mrf.mxu0
    %v262 = vadd.f32 %v122, %v261
    %263 = vmatmul.bf16.gmra.mxu0 %v163
    %v264 = vpop.f32.mrf.mxu0
    %v265 = vadd.f32 %v122, %v264
    %v266 = vpop.f32.mrf.mxu0
    %v267 = vadd.f32 %v122, %v266
    %268 = vdwg.mxu0
    %269 = vst [vmem:[#allocation2] sm:$0xff] %v230
    %270 = vst [vmem:[#allocation2 + $0x8] sm:$0xff] %v232
    %271 = vst [vmem:[#allocation2 + $0x10] sm:$0xff] %v235
    %272 = vst [vmem:[#allocation2 + $0x18] sm:$0xff] %v237
    %273 = vst [vmem:[#allocation2 + $0x20] sm:$0xff] %v240
    %274 = vst [vmem:[#allocation2 + $0x28] sm:$0xff] %v242
    %275 = vst [vmem:[#allocation2 + $0x30] sm:$0xff] %v245
    %276 = vst [vmem:[#allocation2 + $0x38] sm:$0xff] %v247
    %277 = vst [vmem:[#allocation2 + $0x40] sm:$0xff] %v250
    %278 = vst [vmem:[#allocation2 + $0x48] sm:$0xff] %v252
    %279 = vst [vmem:[#allocation2 + $0x50] sm:$0xff] %v255
    %280 = vst [vmem:[#allocation2 + $0x58] sm:$0xff] %v257
    %281 = vst [vmem:[#allocation2 + $0x60] sm:$0xff] %v260
    %282 = vst [vmem:[#allocation2 + $0x68] sm:$0xff] %v262
    %283 = vst [vmem:[#allocation2 + $0x70] sm:$0xff] %v265
    %284 = vst [vmem:[#allocation2 + $0x78] sm:$0xff] %v267
    %v285 = vld [vmem:[#allocation8] sm:$0xf]
    %v286 = vld [vmem:[#allocation8 + $0x4] sm:$0xf]
    %v287 = vld [vmem:[#allocation8 + $0x8] sm:$0xf]
    %v288 = vld [vmem:[#allocation8 + $0xc] sm:$0xf]
    %v289 = vld [vmem:[#allocation8 + $0x10] sm:$0xf]
    %v290 = vld [vmem:[#allocation8 + $0x14] sm:$0xf]
    %v291 = vld [vmem:[#allocation8 + $0x18] sm:$0xf]
    %v292 = vld [vmem:[#allocation8 + $0x1c] sm:$0xf]
    %v293 = vld [vmem:[#allocation8 + $0x20] sm:$0xf]
    %v294 = vld [vmem:[#allocation8 + $0x24] sm:$0xf]
    %v295 = vld [vmem:[#allocation8 + $0x28] sm:$0xf]
    %v296 = vld [vmem:[#allocation8 + $0x2c] sm:$0xf]
    %v297 = vld [vmem:[#allocation8 + $0x30] sm:$0xf]
    %v298 = vld [vmem:[#allocation8 + $0x34] sm:$0xf]
    %v299 = vld [vmem:[#allocation8 + $0x38] sm:$0xf]
    %v300 = vld [vmem:[#allocation8 + $0x3c] sm:$0xf]
    %v301 = vld [vmem:[#allocation2] sm:$0xff]
    %v302 = vld [vmem:[#allocation2 + $0x8] sm:$0xff]
    %v319 = vunpack.c.l.b16 %v285
    %v320 = vunpack.c.l.b16 %v286
    %v321 = vunpack.c.l.b16 %v287
    %v322 = vunpack.c.l.b16 %v288
    %v323 = vunpack.c.l.b16 %v289
    %v324 = vunpack.c.l.b16 %v290
    %v325 = vunpack.c.l.b16 %v291
    %v326 = vunpack.c.l.b16 %v292
    %v327 = vunpack.c.l.b16 %v293
    %v328 = vunpack.c.l.b16 %v294
    %v329 = vunpack.c.l.b16 %v295
    %v330 = vunpack.c.l.b16 %v296
    %v331 = vunpack.c.l.b16 %v297
    %v332 = vunpack.c.l.b16 %v298
    %v333 = vunpack.c.l.b16 %v299
    %v334 = vunpack.c.l.b16 %v300
    %v335 = vpack.c.b16 %v320, %v319
    %v336 = vpack.c.b16 %v322, %v321
    %v337 = vpack.c.b16 %v324, %v323
    %v338 = vpack.c.b16 %v326, %v325
    %v339 = vpack.c.b16 %v328, %v327
    %v340 = vpack.c.b16 %v330, %v329
    %v341 = vpack.c.b16 %v332, %v331
    %v342 = vpack.c.b16 %v334, %v333
    %351 = vmatpush.bf16.msra.mxu0 %v342
    %352 = vmatpush.bf16.msra.mxu0 %v341
    %353 = vmatpush.bf16.msra.mxu0 %v340
    %354 = vmatpush.bf16.msra.mxu0 %v339
    %355 = vmatpush.bf16.msra.mxu0 %v338
    %356 = vmatpush.bf16.msra.mxu0 %v337
    %357 = vmatpush.bf16.msra.mxu0 %v336
    %358 = vmatpush.bf16.msra.mxu0 %v335
    %359 = vmatmul.bf16.gmra.mxu0 0
    %v360 = vpop.f32.mrf.mxu0
    %v361 = vadd.f32 %v301, %v360
    %v362 = vpop.f32.mrf.mxu0
    %v363 = vadd.f32 %v302, %v362
    %364 = vdwg.mxu0
    %v365 = vtanh.pop %v361
    %v366 = vtanh.pop %v363
    %v367 = vpack.c.bf16 %v366, %v365
    %s368 = scalar_lea.vmem [#allocation2], 16
    %v369 = vld [vmem:[%s368] sm:$0xff]
    %v370 = vld [vmem:[%s368 + $0x8] sm:$0xff]
    %371 = vmatpush.bf16.msra.mxu0 %v342
    %372 = vmatpush.bf16.msra.mxu0 %v341
    %373 = vmatpush.bf16.msra.mxu0 %v340
    %374 = vmatpush.bf16.msra.mxu0 %v339
    %375 = vmatpush.bf16.msra.mxu0 %v338
    %376 = vmatpush.bf16.msra.mxu0 %v337
    %377 = vmatpush.bf16.msra.mxu0 %v336
    %378 = vmatpush.bf16.msra.mxu0 %v335
    %379 = vmatmul.bf16.gmra.mxu0 %v367
    %v380 = vpop.f32.mrf.mxu0
    %v381 = vadd.f32 %v369, %v380
    %v382 = vpop.f32.mrf.mxu0
    %v383 = vadd.f32 %v370, %v382
    %384 = vdwg.mxu0
    %v385 = vtanh.pop %v381
    %v386 = vtanh.pop %v383
    %v387 = vpack.c.bf16 %v386, %v385
    %s388 = scalar_lea.vmem [#allocation2], 32
    %v389 = vld [vmem:[%s388] sm:$0xff]
    %v390 = vld [vmem:[%s388 + $0x8] sm:$0xff]
    %391 = vmatpush.bf16.msra.mxu0 %v342
    %392 = vmatpush.bf16.msra.mxu0 %v341
    %393 = vmatpush.bf16.msra.mxu0 %v340
    %394 = vmatpush.bf16.msra.mxu0 %v339
    %395 = vmatpush.bf16.msra.mxu0 %v338
    %396 = vmatpush.bf16.msra.mxu0 %v337
    %397 = vmatpush.bf16.msra.mxu0 %v336
    %398 = vmatpush.bf16.msra.mxu0 %v335
    %399 = vmatmul.bf16.gmra.mxu0 %v387
    %v400 = vpop.f32.mrf.mxu0
    %v401 = vadd.f32 %v389, %v400
    %v402 = vpop.f32.mrf.mxu0
    %v403 = vadd.f32 %v390, %v402
    %404 = vdwg.mxu0
    %v405 = vtanh.pop %v401
    %v406 = vtanh.pop %v403
    %v407 = vpack.c.bf16 %v406, %v405
    %s408 = scalar_lea.vmem [#allocation2], 48
    %v409 = vld [vmem:[%s408] sm:$0xff]
    %v410 = vld [vmem:[%s408 + $0x8] sm:$0xff]
    %411 = vmatpush.bf16.msra.mxu0 %v342
    %412 = vmatpush.bf16.msra.mxu0 %v341
    %413 = vmatpush.bf16.msra.mxu0 %v340
    %414 = vmatpush.bf16.msra.mxu0 %v339
    %415 = vmatpush.bf16.msra.mxu0 %v338
    %416 = vmatpush.bf16.msra.mxu0 %v337
    %417 = vmatpush.bf16.msra.mxu0 %v336
    %418 = vmatpush.bf16.msra.mxu0 %v335
    %419 = vmatmul.bf16.gmra.mxu0 %v407
    %v420 = vpop.f32.mrf.mxu0
    %v421 = vadd.f32 %v409, %v420
    %v422 = vpop.f32.mrf.mxu0
    %v423 = vadd.f32 %v410, %v422
    %424 = vdwg.mxu0
    %v425 = vtanh.pop %v421
    %v426 = vtanh.pop %v423
    %v427 = vpack.c.bf16 %v426, %v425
    %s428 = scalar_lea.vmem [#allocation2], 64
    %v429 = vld [vmem:[%s428] sm:$0xff]
    %v430 = vld [vmem:[%s428 + $0x8] sm:$0xff]
    %431 = vmatpush.bf16.msra.mxu0 %v342
    %432 = vmatpush.bf16.msra.mxu0 %v341
    %433 = vmatpush.bf16.msra.mxu0 %v340
    %434 = vmatpush.bf16.msra.mxu0 %v339
    %435 = vmatpush.bf16.msra.mxu0 %v338
    %436 = vmatpush.bf16.msra.mxu0 %v337
    %437 = vmatpush.bf16.msra.mxu0 %v336
    %438 = vmatpush.bf16.msra.mxu0 %v335
    %439 = vmatmul.bf16.gmra.mxu0 %v427
    %v440 = vpop.f32.mrf.mxu0
    %v441 = vadd.f32 %v429, %v440
    %v442 = vpop.f32.mrf.mxu0
    %v443 = vadd.f32 %v430, %v442
    %444 = vdwg.mxu0
    %v445 = vtanh.pop %v441
    %v446 = vtanh.pop %v443
    %v447 = vpack.c.bf16 %v446, %v445
    %s448 = scalar_lea.vmem [#allocation2], 80
    %v449 = vld [vmem:[%s448] sm:$0xff]
    %v450 = vld [vmem:[%s448 + $0x8] sm:$0xff]
    %451 = vmatpush.bf16.msra.mxu0 %v342
    %452 = vmatpush.bf16.msra.mxu0 %v341
    %453 = vmatpush.bf16.msra.mxu0 %v340
    %454 = vmatpush.bf16.msra.mxu0 %v339
    %455 = vmatpush.bf16.msra.mxu0 %v338
    %456 = vmatpush.bf16.msra.mxu0 %v337
    %457 = vmatpush.bf16.msra.mxu0 %v336
    %458 = vmatpush.bf16.msra.mxu0 %v335
    %459 = vmatmul.bf16.gmra.mxu0 %v447
    %v460 = vpop.f32.mrf.mxu0
    %v461 = vadd.f32 %v449, %v460
    %v462 = vpop.f32.mrf.mxu0
    %v463 = vadd.f32 %v450, %v462
    %464 = vdwg.mxu0
    %v465 = vtanh.pop %v461
    %v466 = vtanh.pop %v463
    %v467 = vpack.c.bf16 %v466, %v465
    %s468 = scalar_lea.vmem [#allocation2], 96
    %v469 = vld [vmem:[%s468] sm:$0xff]
    %v470 = vld [vmem:[%s468 + $0x8] sm:$0xff]
    %471 = vmatpush.bf16.msra.mxu0 %v342
    %472 = vmatpush.bf16.msra.mxu0 %v341
    %473 = vmatpush.bf16.msra.mxu0 %v340
    %474 = vmatpush.bf16.msra.mxu0 %v339
    %475 = vmatpush.bf16.msra.mxu0 %v338
    %476 = vmatpush.bf16.msra.mxu0 %v337
    %477 = vmatpush.bf16.msra.mxu0 %v336
    %478 = vmatpush.bf16.msra.mxu0 %v335
    %479 = vmatmul.bf16.gmra.mxu0 %v467
    %v480 = vpop.f32.mrf.mxu0
    %v481 = vadd.f32 %v469, %v480
    %v482 = vpop.f32.mrf.mxu0
    %v483 = vadd.f32 %v470, %v482
    %484 = vdwg.mxu0
    %v485 = vtanh.pop %v481
    %v486 = vtanh.pop %v483
    %v487 = vpack.c.bf16 %v486, %v485
    %s488 = scalar_lea.vmem [#allocation2], 112
    %v489 = vld [vmem:[%s488] sm:$0xff]
    %v490 = vld [vmem:[%s488 + $0x8] sm:$0xff]
    %491 = vmatpush.bf16.msra.mxu0 %v342
    %492 = vmatpush.bf16.msra.mxu0 %v341
    %493 = vmatpush.bf16.msra.mxu0 %v340
    %494 = vmatpush.bf16.msra.mxu0 %v339
    %495 = vmatpush.bf16.msra.mxu0 %v338
    %496 = vmatpush.bf16.msra.mxu0 %v337
    %497 = vmatpush.bf16.msra.mxu0 %v336
    %498 = vmatpush.bf16.msra.mxu0 %v335
    %499 = vmatmul.bf16.gmra.mxu0 %v487
    %v500 = vpop.f32.mrf.mxu0
    %v501 = vadd.f32 %v489, %v500
    %v502 = vpop.f32.mrf.mxu0
    %v503 = vadd.f32 %v490, %v502
    %504 = vdwg.mxu0
    %v505 = vtanh.pop %v501
    %v506 = vtanh.pop %v503
    %v507 = vpack.c.bf16 %v506, %v505
    %v508 = vld [vmem:[#allocation9] sm:$0xf]
    %v509 = vld [vmem:[#allocation9 + $0x4] sm:$0xf]
    %v510 = vld [vmem:[#allocation9 + $0x8] sm:$0xf]
    %v511 = vld [vmem:[#allocation9 + $0xc] sm:$0xf]
    %v512 = vld [vmem:[#allocation9 + $0x10] sm:$0xf]
    %v513 = vld [vmem:[#allocation9 + $0x14] sm:$0xf]
    %v514 = vld [vmem:[#allocation9 + $0x18] sm:$0xf]
    %v515 = vld [vmem:[#allocation9 + $0x1c] sm:$0xf]
    %v516 = vld [vmem:[#allocation9 + $0x20] sm:$0xf]
    %v517 = vld [vmem:[#allocation9 + $0x24] sm:$0xf]
    %v518 = vld [vmem:[#allocation9 + $0x28] sm:$0xf]
    %v519 = vld [vmem:[#allocation9 + $0x2c] sm:$0xf]
    %v520 = vld [vmem:[#allocation9 + $0x30] sm:$0xf]
    %v521 = vld [vmem:[#allocation9 + $0x34] sm:$0xf]
    %v522 = vld [vmem:[#allocation9 + $0x38] sm:$0xf]
    %v523 = vld [vmem:[#allocation9 + $0x3c] sm:$0xf]
    %v524 = vld [vmem:[%s5] sm:$0x1]
    %v526 = vperm.slane %v524, 0
    %v544 = vunpack.c.l.b16 %v508
    %v545 = vunpack.c.l.b16 %v509
    %v546 = vunpack.c.l.b16 %v510
    %v547 = vunpack.c.l.b16 %v511
    %v548 = vunpack.c.l.b16 %v512
    %v549 = vunpack.c.l.b16 %v513
    %v550 = vunpack.c.l.b16 %v514
    %v551 = vunpack.c.l.b16 %v515
    %v552 = vunpack.c.l.b16 %v516
    %v553 = vunpack.c.l.b16 %v517
    %v554 = vunpack.c.l.b16 %v518
    %v555 = vunpack.c.l.b16 %v519
    %v556 = vunpack.c.l.b16 %v520
    %v557 = vunpack.c.l.b16 %v521
    %v558 = vunpack.c.l.b16 %v522
    %v559 = vunpack.c.l.b16 %v523
    %v560 = vpack.c.b16 %v545, %v544
    %v561 = vpack.c.b16 %v547, %v546
    %v562 = vpack.c.b16 %v549, %v548
    %v563 = vpack.c.b16 %v551, %v550
    %v564 = vpack.c.b16 %v553, %v552
    %v565 = vpack.c.b16 %v555, %v554
    %v566 = vpack.c.b16 %v557, %v556
    %v567 = vpack.c.b16 %v559, %v558
    %576 = vmatpush.bf16.msra.mxu0 %v567
    %577 = vmatpush.bf16.msra.mxu0 %v566
    %578 = vmatpush.bf16.msra.mxu0 %v565
    %579 = vmatpush.bf16.msra.mxu0 %v564
    %580 = vmatpush.bf16.msra.mxu0 %v563
    %581 = vmatpush.bf16.msra.mxu0 %v562
    %582 = vmatpush.bf16.msra.mxu0 %v561
    %583 = vmatpush.bf16.msra.mxu0 %v560
    %584 = vmatmul.bf16.gmra.mxu0 %v507
    %v585 = vpop.f32.mrf.mxu0
    %v586 = vadd.f32 %v526, %v585
    %v587 = vpop.f32.mrf.mxu0
    %v588 = vadd.f32 %v526, %v587
    %589 = vdwg.mxu0
    %590 = vst [vmem:[#allocation11] sm:$0xff] %v586
    %591 = vst [vmem:[#allocation11 + $0x8] sm:$0xff] %v588
    // Predicated region
    $region42: #{tpu_custom_call.1} parent=1 // pred_check
      _
    $region43: #{tpu_custom_call.1} parent=1 // pred_check_branch
      %593 = sbr.rel (0) target = $region45
    $region44: #{tpu_custom_call.1} parent=1 // pred_region
      %595 = vsyncadd [#allocation5], 0
      %s596 = sshll.u32 [#allocation11], 4
      %s597 = int_to_ptr.vmem [resolvable:$true] %s596
      %s598 = sshll.u32 %s6, 4
      %s599 = int_to_ptr.hbm [resolvable:$true] %s598
      %604 = dma.vmem_to_hbm [thread:$0]  %s597, 256, %s599, [#allocation5], 128, 128, 8
    $region45: #{tpu_custom_call.1} parent=1 // pred_fallthru
      _
    // Predicated region
    $region46: #{tpu_custom_call.1} parent=1 // pred_check
      _
    $region47: #{tpu_custom_call.1} parent=1 // pred_check_branch
      %606 = sbr.rel (0) target = $region49
    $region48: #{tpu_custom_call.1} parent=1 // pred_region
      %608 = dma.done [#allocation5], 256
    $region49: #{tpu_custom_call.1} parent=1 // pred_fallthru
      _
    %609 = vsyncpa [#allocation4], 1
    %610 = vsyncpa [#allocation7], 1
    %611 = vsyncpa [#allocation10], 1
    %612 = vsyncpa [#allocation5], 1

</llo_original>
